<compile_context>
chip_gen: v7x
topology: tpu7x:2x2x1
jax: 0.10.0
libtpu: 0.0.40
codegen_flags: <defaults>
</compile_context>

<pallas_src>
import jax
import jax.numpy as jnp
import numpy as np
from jax.experimental import pallas as pl
from jax.experimental.pallas import tpu as pltpu

_NEG_BIG = -1e30          # finite "minus infinity" used to mask padded rows
_DEFAULT_TILE_N = 512     # multiple of 128; ~85% of HBM roofline on v5e/v6e


def attention_mil_forward(x, params, *, tile_n=None, compute_dtype=jnp.bfloat16):
    """x: (1, N, E).  Returns (Y_prob (K,1), Y_hat (K,1), A (K,N))."""
    wv, bv, wwT, wc, bc = params            # (E,H), (1,H), (K,H), (1,E*K), (1,)
    x2d = jnp.squeeze(x, axis=0)            # (N, E) -- metadata-only reshape
    N, E = x2d.shape
    H = wv.shape[1]
    K = wwT.shape[0]
    assert K == 1, "classifier Linear(E*K, 1) applied to (K, E) requires K == 1"

    if tile_n is None:
        tile_n = _DEFAULT_TILE_N
    if N <= tile_n:
        tile_n = N                          # single full block: no masking needed
    elif tile_n % 128 != 0:
        raise ValueError("tile_n must be a multiple of 128 when tiling over N")
    num_tiles = pl.cdiv(N, tile_n)
    ragged = (N % tile_n) != 0

    # Keep the streamed bag (and Wv) in the compute dtype: halves HBM traffic of x.
    # Callers that already store x in bf16 pay zero extra copies here.
    if x2d.dtype != compute_dtype:
        x2d = x2d.astype(compute_dtype)
    wv_c = wv.astype(compute_dtype)
    bv_f = bv.astype(jnp.float32)
    wwT_f = wwT.astype(jnp.float32)
    wc_f = wc.astype(jnp.float32)
    bc_f = bc.astype(jnp.float32)

    def kernel(x_ref, wv_ref, bv_ref, wwt_ref, wc_ref, bc_ref,
               yprob_ref, yhat_ref, s_ref, mout_ref, lout_ref,
               m_sc, l_sc, z_sc):
        i = pl.program_id(0)

        @pl.when(i == 0)
        def _init():
            m_sc[...] = jnp.full_like(m_sc, _NEG_BIG)
            l_sc[...] = jnp.zeros_like(l_sc)
            z_sc[...] = jnp.zeros_like(z_sc)

        x_t = x_ref[...]                                        # (T, E) compute_dtype
        if ragged:
            # Rows past the true bag length hold unspecified padding from the partial
            # DMA; zero them so 0 * NaN cannot poison the p @ x accumulation below.
            row = jax.lax.broadcasted_iota(jnp.int32, (tile_n, 1), 0) + i * tile_n
            x_t = jnp.where(row < N, x_t, jnp.zeros_like(x_t))

        h = jnp.tanh(
            jnp.dot(x_t, wv_ref[...], preferred_element_type=jnp.float32)
            + bv_ref[...])                                      # (T, H) f32

        # attention scores, lane-dense (K, T); Linear2's bias is a per-branch
        # constant that cancels in the softmax over N, so it is omitted.
        # TODO(synk): if the bundle dump shows a large vxpose of the (T,H) h tile
        #             here, switch to u = h @ Ww^T (T,K) and reorient only the tiny
        #             (T,K) slab to (K,T).
        s = jnp.einsum('kh,nh->kn', wwt_ref[...], h,
                       preferred_element_type=jnp.float32)      # (K, T) f32
        if ragged:
            col = jax.lax.broadcasted_iota(jnp.int32, s.shape, 1) + i * tile_n
            s = jnp.where(col < N, s, _NEG_BIG)
        s_ref[...] = s                                          # raw masked scores out

        # online softmax accumulation of denominator and weighted bag embedding
        m_new = jnp.maximum(m_sc[...], jnp.max(s, axis=1, keepdims=True))   # (K, 1)
        alpha = jnp.exp(m_sc[...] - m_new)
        p = jnp.exp(s - m_new)                                  # (K, T) f32, lane-dense
        l_sc[...] = alpha * l_sc[...] + jnp.sum(p, axis=1, keepdims=True)
        z_sc[...] = alpha * z_sc[...] + jnp.dot(p.astype(x_t.dtype), x_t,
                                                preferred_element_type=jnp.float32)
        m_sc[...] = m_new

        @pl.when(i == pl.num_programs(0) - 1)
        def _finalize():
            l = l_sc[...]
            z = z_sc[...] / l                                   # (K, E) = softmax(S) @ x
            # classifier as a VPU reduction: Z @ Wc^T + bc   (K == 1)
            logits = jnp.sum(z * wc_ref[...], axis=1, keepdims=True) + bc_ref[0]
            y_prob = jax.nn.sigmoid(logits)                     # (K, 1)
            yprob_ref[...] = y_prob
            yhat_ref[...] = (y_prob >= 0.5).astype(jnp.float32)
            mout_ref[...] = m_sc[...]
            lout_ref[...] = l

    const2d = lambda i: (0, 0)

    # Derive the scoped-VMEM limit from what this launch actually needs
    # (double-buffered x / score tiles + weights + scratch), not a hard-coded value.
    x_item = jnp.dtype(compute_dtype).itemsize
    needed = (
        2 * tile_n * E * x_item                              # double-buffered x tile
        + 2 * K * tile_n * 4                                 # double-buffered score tile
        + 2 * (E * H * x_item + H * 4 + K * H * 4 + E * 4)   # weights
        + (2 * K + K * E) * 4                                # m/l/z scratch
        + 8 * K * 4                                          # tiny (K,1) outputs
    )
    vmem_limit = int(min(max(2 * needed, 16 << 20), 64 << 20))

    out_shapes = (
        jax.ShapeDtypeStruct((K, 1), jnp.float32),      # Y_prob
        jax.ShapeDtypeStruct((K, 1), jnp.float32),      # Y_hat
        jax.ShapeDtypeStruct((K, N), jnp.float32),      # raw attention scores, lane-dense
        jax.ShapeDtypeStruct((K, 1), jnp.float32),      # softmax running max m
        jax.ShapeDtypeStruct((K, 1), jnp.float32),      # softmax denominator l
    )

    # TODO(synk): v7x -- split the N-tiles across both TensorCores (leading "parallel"
    #             grid axis with per-core partial (m, l, z) outputs combined in the
    #             wrapper) and bump tile_n to 1024-2048 / pl.Buffered(3) to amortize
    #             per-step overhead against the 3.2 TB/s HBM path.
    y_prob, y_hat, scores, m, l = pl.pallas_call(
        kernel,
        out_shape=out_shapes,
        grid=(num_tiles,),
        in_specs=[
            pl.BlockSpec((tile_n, E), lambda i: (i, 0)),           # x tile (streamed)
            pl.BlockSpec((E, H), const2d),                         # Wv (pre-transposed)
            pl.BlockSpec((1, H), const2d),                         # bv
            pl.BlockSpec((K, H), const2d),                         # Ww (torch layout)
            pl.BlockSpec((1, E), const2d),                         # Wc (torch layout)
            pl.BlockSpec(memory_space=pltpu.MemorySpace.SMEM),     # bc scalar in SMEM
        ],
        out_specs=(
            pl.BlockSpec((K, 1), const2d),
            pl.BlockSpec((K, 1), const2d),
            pl.BlockSpec((K, tile_n), lambda i: (0, i)),
            pl.BlockSpec((K, 1), const2d),
            pl.BlockSpec((K, 1), const2d),
        ),
        scratch_shapes=[
            pltpu.VMEM((K, 1), jnp.float32),    # running max m
            pltpu.VMEM((K, 1), jnp.float32),    # running denom l
            pltpu.VMEM((K, E), jnp.float32),    # running weighted sum z
        ],
        compiler_params=pltpu.CompilerParams(
            dimension_semantics=("arbitrary",),
            vmem_limit_bytes=vmem_limit),
    )(x2d, wv_c, bv_f, wwT_f, wc_f, bc_f)

    # A = softmax(scores): the kernel already produced max m and denom l, so this is
    # one tiny fused exp/divide over the (K, N) score row (no second max/sum pass).
    A = jnp.exp(scores - m) / l
    return y_prob, y_hat, A


def init_params(key, embed_size, hidden_size, branches):
    ks = jax.random.split(key, 6)
    scale = 0.05
    wv = scale * jax.random.normal(ks[0], (embed_size, hidden_size), jnp.float32)
    bv = scale * jax.random.normal(ks[1], (1, hidden_size), jnp.float32)
    wwT = scale * jax.random.normal(ks[2], (branches, hidden_size), jnp.float32)
    bw = scale * jax.random.normal(ks[3], (branches,), jnp.float32)   # reference only
    wc = scale * jax.random.normal(ks[4], (1, embed_size * branches), jnp.float32)
    bc = scale * jax.random.normal(ks[5], (1,), jnp.float32)
    return (wv, bv, wwT, wc, bc), bw


def reference_forward(x, wv, bv, wwT, bw, wc, bc):
    """Pure-JAX f32 transcription of the PyTorch module (bw included to show it cancels)."""
    hi = jax.lax.Precision.HIGHEST
    x2 = jnp.squeeze(x, axis=0)
    h = jnp.tanh(jnp.dot(x2, wv, precision=hi) + bv)
    s = jnp.dot(h, wwT.T, precision=hi) + bw                      # (N, K)
    A = jax.nn.softmax(s.T, axis=1)                               # (K, N)
    Z = jnp.dot(A, x2, precision=hi)                              # (K, E)
    y_prob = jax.nn.sigmoid(jnp.dot(Z, wc.T, precision=hi) + bc)  # (K, 1)
    y_hat = (y_prob >= 0.5).astype(jnp.float32)
    return y_prob, y_hat, A


if __name__ == "__main__":
    EMBED, HIDDEN, BRANCHES = 32, 16, 1
    N = 200                      # 2 tiles of 128 rows -> exercises tiling + ragged masking

    key = jax.random.PRNGKey(0)
    k_x, k_p = jax.random.split(key)
    x = jax.random.normal(k_x, (1, N, EMBED), jnp.float32)
    params, bw = init_params(k_p, EMBED, HIDDEN, BRANCHES)

    y_prob, y_hat, A = attention_mil_forward(x, params, tile_n=128)
    jax.block_until_ready((y_prob, y_hat, A))

    assert y_prob.shape == (BRANCHES, 1)
    assert y_hat.shape == (BRANCHES, 1)
    assert A.shape == (BRANCHES, N)

    wv, bv, wwT, wc, bc = params
    yp_ref, _, A_ref = reference_forward(x, wv, bv, wwT, bw, wc, bc)
    # bf16 x / Wv streaming + bf16 MXU passes -> tolerances looser than pure f32.
    np.testing.assert_allclose(np.asarray(A), np.asarray(A_ref), rtol=2e-2, atol=5e-5)
    np.testing.assert_allclose(np.asarray(y_prob), np.asarray(yp_ref), rtol=2e-2, atol=5e-3)
    assert abs(float(jnp.sum(A)) - float(BRANCHES)) < 1e-3
    assert bool(jnp.all(y_hat == (y_prob >= 0.5).astype(jnp.float32)))

    print("KERNEL_OK")
</pallas_src>

<mosaic_0001>
module attributes {stable_mosaic.version = 11 : i64} {
  func.func @kernel(%arg0: i32, %arg1: memref<128x32xbf16, #tpu.memory_space<vmem>>, %arg2: memref<32x16xbf16, #tpu.memory_space<vmem>>, %arg3: memref<1x16xf32, #tpu.memory_space<vmem>>, %arg4: memref<1x16xf32, #tpu.memory_space<vmem>>, %arg5: memref<1x32xf32, #tpu.memory_space<vmem>>, %arg6: memref<1xf32, #tpu.memory_space<smem>>, %arg7: memref<1x1xf32, #tpu.memory_space<vmem>>, %arg8: memref<1x1xf32, #tpu.memory_space<vmem>>, %arg9: memref<1x128xf32, #tpu.memory_space<vmem>>, %arg10: memref<1x1xf32, #tpu.memory_space<vmem>>, %arg11: memref<1x1xf32, #tpu.memory_space<vmem>>, %arg12: memref<1x1xf32, #tpu.memory_space<vmem>>, %arg13: memref<1x1xf32, #tpu.memory_space<vmem>>, %arg14: memref<1x32xf32, #tpu.memory_space<vmem>>) attributes {dimension_semantics = [#tpu.dimension_semantics<arbitrary>], iteration_bounds = array<i64: 2>, scalar_prefetch = 0 : i64, scratch_operands = 3 : i64, tpu.core_type = #tpu.core_type<tc>, window_params = [{transform_indices = @transform_0, window_bounds = array<i64: 128, 32>}, {pipeline_mode = #tpu.pipeline_mode<synchronous>, transform_indices = @transform_1, window_bounds = array<i64: 32, 16>}, {pipeline_mode = #tpu.pipeline_mode<synchronous>, transform_indices = @transform_2, window_bounds = array<i64: 1, 16>}, {pipeline_mode = #tpu.pipeline_mode<synchronous>, transform_indices = @transform_3, window_bounds = array<i64: 1, 16>}, {pipeline_mode = #tpu.pipeline_mode<synchronous>, transform_indices = @transform_4, window_bounds = array<i64: 1, 32>}, {transform_indices = @transform_5, window_bounds = array<i64: 1>}, {pipeline_mode = #tpu.pipeline_mode<synchronous>, transform_indices = @transform_6, window_bounds = array<i64: 1, 1>}, {pipeline_mode = #tpu.pipeline_mode<synchronous>, transform_indices = @transform_7, window_bounds = array<i64: 1, 1>}, {transform_indices = @transform_8, window_bounds = array<i64: 1, 128>}, {pipeline_mode = #tpu.pipeline_mode<synchronous>, transform_indices = @transform_9, window_bounds = array<i64: 1, 1>}, {pipeline_mode = #tpu.pipeline_mode<synchronous>, transform_indices = @transform_10, window_bounds = array<i64: 1, 1>}]} {
    %c0_i32 = arith.constant 0 : i32
    %0 = arith.cmpi eq, %arg0, %c0_i32 : i32
    %1 = arith.extui %0 : i1 to i32
    %c0_i32_0 = arith.constant 0 : i32
    %2 = arith.cmpi ne, %1, %c0_i32_0 : i32
    scf.if %2 {
      %cst_33 = arith.constant -1.000000e+30 : f32
      %58 = vector.broadcast %cst_33 : f32 to vector<1x1xf32>
      %c0_34 = arith.constant 0 : index
      %c0_35 = arith.constant 0 : index
      %59 = vector.load %arg12[%c0_34, %c0_35] : memref<1x1xf32, #tpu.memory_space<vmem>>, vector<1x1xf32>
      tpu.vector_store %arg12[%c0_34, %c0_35], %58 {strides = array<i32>} : memref<1x1xf32, #tpu.memory_space<vmem>>, vector<1x1xf32>,
      %cst_36 = arith.constant 0.000000e+00 : f32
      %60 = vector.broadcast %cst_36 : f32 to vector<1x1xf32>
      %c0_37 = arith.constant 0 : index
      %c0_38 = arith.constant 0 : index
      %61 = vector.load %arg13[%c0_37, %c0_38] : memref<1x1xf32, #tpu.memory_space<vmem>>, vector<1x1xf32>
      tpu.vector_store %arg13[%c0_37, %c0_38], %60 {strides = array<i32>} : memref<1x1xf32, #tpu.memory_space<vmem>>, vector<1x1xf32>,
      %cst_39 = arith.constant 0.000000e+00 : f32
      %62 = vector.broadcast %cst_39 : f32 to vector<1x32xf32>
      %c0_40 = arith.constant 0 : index
      %c0_41 = arith.constant 0 : index
      %63 = vector.load %arg14[%c0_40, %c0_41] : memref<1x32xf32, #tpu.memory_space<vmem>>, vector<1x32xf32>
      tpu.vector_store %arg14[%c0_40, %c0_41], %62 {strides = array<i32>} : memref<1x32xf32, #tpu.memory_space<vmem>>, vector<1x32xf32>,
    } else {
    }
    %c0 = arith.constant 0 : index
    %c0_1 = arith.constant 0 : index
    %3 = vector.load %arg1[%c0, %c0_1] : memref<128x32xbf16, #tpu.memory_space<vmem>>, vector<128x32xbf16>
    %4 = tpu.iota {dimensions = array<i32: 0>} : vector<128x1xi32>
    %c128_i32 = arith.constant 128 : i32
    %5 = arith.muli %arg0, %c128_i32 : i32
    %6 = vector.broadcast %5 : i32 to vector<128x1xi32>
    %7 = arith.addi %4, %6 : vector<128x1xi32>
    %c200_i32 = arith.constant 200 : i32
    %8 = vector.broadcast %c200_i32 : i32 to vector<128x1xi32>
    %9 = arith.cmpi slt, %7, %8 : vector<128x1xi32>
    %cst = arith.constant 0.000000e+00 : bf16
    %10 = vector.broadcast %cst : bf16 to vector<128x32xbf16>
    %11 = vector.shape_cast %9 : vector<128x1xi1> to vector<128x1xi1>
    %12 = vector.broadcast %11 : vector<128x1xi1> to vector<128x32xi1>
    %13 = arith.select %12, %3, %10 : vector<128x32xi1>, vector<128x32xbf16>
    %c0_2 = arith.constant 0 : index
    %c0_3 = arith.constant 0 : index
    %14 = vector.load %arg2[%c0_2, %c0_3] : memref<32x16xbf16, #tpu.memory_space<vmem>>, vector<32x16xbf16>
    %cst_4 = arith.constant dense<0.000000e+00> : vector<128x16xf32>
    %15 = tpu.matmul %13, %14, %cst_4 {dimension_numbers = #tpu.dot_dimension_numbers<[1], [0], [0], [1], [0, 0, 1, 1], [], []>} : vector<128x32xbf16>, vector<32x16xbf16>, vector<128x16xf32> -> vector<128x16xf32>
    %c0_5 = arith.constant 0 : index
    %c0_6 = arith.constant 0 : index
    %16 = vector.load %arg3[%c0_5, %c0_6] : memref<1x16xf32, #tpu.memory_space<vmem>>, vector<1x16xf32>
    %17 = vector.broadcast %16 : vector<1x16xf32> to vector<128x16xf32>
    %18 = arith.addf %15, %17 : vector<128x16xf32>
    %19 = math.tanh %18 : vector<128x16xf32>
    %c0_7 = arith.constant 0 : index
    %c0_8 = arith.constant 0 : index
    %20 = vector.load %arg4[%c0_7, %c0_8] : memref<1x16xf32, #tpu.memory_space<vmem>>, vector<1x16xf32>
    "tpu.trace_start"() <{level = 10 : i32, message = "kh,nh->kn"}> : () -> ()
    %cst_9 = arith.constant dense<0.000000e+00> : vector<1x128xf32>
    %21 = tpu.matmul %20, %19, %cst_9 {dimension_numbers = #tpu.dot_dimension_numbers<[1], [1], [0], [0], [0, 0, 1, 0], [], []>} : vector<1x16xf32>, vector<128x16xf32>, vector<1x128xf32> -> vector<1x128xf32>
    "tpu.trace_stop"() : () -> ()
    %22 = tpu.iota {dimensions = array<i32: 1>} : vector<1x128xi32>
    %c128_i32_10 = arith.constant 128 : i32
    %23 = arith.muli %arg0, %c128_i32_10 : i32
    %24 = vector.broadcast %23 : i32 to vector<1x128xi32>
    %25 = arith.addi %22, %24 : vector<1x128xi32>
    %c200_i32_11 = arith.constant 200 : i32
    %26 = vector.broadcast %c200_i32_11 : i32 to vector<1x128xi32>
    %27 = arith.cmpi slt, %25, %26 : vector<1x128xi32>
    %cst_12 = arith.constant -1.000000e+30 : f32
    %28 = vector.broadcast %cst_12 : f32 to vector<1x128xf32>
    %29 = arith.select %27, %21, %28 : vector<1x128xi1>, vector<1x128xf32>
    %c0_13 = arith.constant 0 : index
    %c0_14 = arith.constant 0 : index
    %30 = vector.load %arg9[%c0_13, %c0_14] : memref<1x128xf32, #tpu.memory_space<vmem>>, vector<1x128xf32>
    tpu.vector_store %arg9[%c0_13, %c0_14], %29 {strides = array<i32>} : memref<1x128xf32, #tpu.memory_space<vmem>>, vector<1x128xf32>,
    %c0_15 = arith.constant 0 : index
    %c0_16 = arith.constant 0 : index
    %31 = vector.load %arg12[%c0_15, %c0_16] : memref<1x1xf32, #tpu.memory_space<vmem>>, vector<1x1xf32>
    %cst_17 = arith.constant dense<0xFF800000> : vector<1xf32>
    %32 = vector.multi_reduction <maximumf>, %29, %cst_17 [1] : vector<1x128xf32> to vector<1xf32>
    %33 = vector.shape_cast %32 : vector<1xf32> to vector<1x1xf32>
    %34 = arith.maximumf %31, %33 : vector<1x1xf32>
    %c0_18 = arith.constant 0 : index
    %c0_19 = arith.constant 0 : index
    %35 = vector.load %arg12[%c0_18, %c0_19] : memref<1x1xf32, #tpu.memory_space<vmem>>, vector<1x1xf32>
    %36 = arith.subf %35, %34 : vector<1x1xf32>
    %37 = math.exp %36 : vector<1x1xf32>
    %38 = vector.broadcast %34 : vector<1x1xf32> to vector<1x128xf32>
    %39 = arith.subf %29, %38 : vector<1x128xf32>
    %40 = math.exp %39 : vector<1x128xf32>
    %c0_20 = arith.constant 0 : index
    %c0_21 = arith.constant 0 : index
    %41 = vector.load %arg13[%c0_20, %c0_21] : memref<1x1xf32, #tpu.memory_space<vmem>>, vector<1x1xf32>
    %42 = arith.mulf %37, %41 : vector<1x1xf32>
    %cst_22 = arith.constant dense<0.000000e+00> : vector<1xf32>
    %43 = vector.multi_reduction <add>, %40, %cst_22 [1] : vector<1x128xf32> to vector<1xf32>
    %44 = vector.shape_cast %43 : vector<1xf32> to vector<1x1xf32>
    %45 = arith.addf %42, %44 : vector<1x1xf32>
    %c0_23 = arith.constant 0 : index
    %c0_24 = arith.constant 0 : index
    %46 = vector.load %arg13[%c0_23, %c0_24] : memref<1x1xf32, #tpu.memory_space<vmem>>, vector<1x1xf32>
    tpu.vector_store %arg13[%c0_23, %c0_24], %45 {strides = array<i32>} : memref<1x1xf32, #tpu.memory_space<vmem>>, vector<1x1xf32>,
    %c0_25 = arith.constant 0 : index
    %c0_26 = arith.constant 0 : index
    %47 = vector.load %arg14[%c0_25, %c0_26] : memref<1x32xf32, #tpu.memory_space<vmem>>, vector<1x32xf32>
    %48 = vector.broadcast %37 : vector<1x1xf32> to vector<1x32xf32>
    %49 = arith.mulf %48, %47 : vector<1x32xf32>
    %50 = arith.truncf %40 : vector<1x128xf32> to vector<1x128xbf16>
    %cst_27 = arith.constant dense<0.000000e+00> : vector<1x32xf32>
    %51 = tpu.matmul %50, %13, %cst_27 {dimension_numbers = #tpu.dot_dimension_numbers<[1], [0], [0], [1], [0, 0, 1, 1], [], []>} : vector<1x128xbf16>, vector<128x32xbf16>, vector<1x32xf32> -> vector<1x32xf32>
    %52 = arith.addf %49, %51 : vector<1x32xf32>
    %c0_28 = arith.constant 0 : index
    %c0_29 = arith.constant 0 : index
    %53 = vector.load %arg14[%c0_28, %c0_29] : memref<1x32xf32, #tpu.memory_space<vmem>>, vector<1x32xf32>
    tpu.vector_store %arg14[%c0_28, %c0_29], %52 {strides = array<i32>} : memref<1x32xf32, #tpu.memory_space<vmem>>, vector<1x32xf32>,
    %c0_30 = arith.constant 0 : index
    %c0_31 = arith.constant 0 : index
    %54 = vector.load %arg12[%c0_30, %c0_31] : memref<1x1xf32, #tpu.memory_space<vmem>>, vector<1x1xf32>
    tpu.vector_store %arg12[%c0_30, %c0_31], %34 {strides = array<i32>} : memref<1x1xf32, #tpu.memory_space<vmem>>, vector<1x1xf32>,
    %c1_i32 = arith.constant 1 : i32
    %55 = arith.cmpi eq, %arg0, %c1_i32 : i32
    %56 = arith.extui %55 : i1 to i32
    %c0_i32_32 = arith.constant 0 : i32
    %57 = arith.cmpi ne, %56, %c0_i32_32 : i32
    scf.if %57 {
      %c0_33 = arith.constant 0 : index
      %c0_34 = arith.constant 0 : index
      %58 = vector.load %arg13[%c0_33, %c0_34] : memref<1x1xf32, #tpu.memory_space<vmem>>, vector<1x1xf32>
      %c0_35 = arith.constant 0 : index
      %c0_36 = arith.constant 0 : index
      %59 = vector.load %arg14[%c0_35, %c0_36] : memref<1x32xf32, #tpu.memory_space<vmem>>, vector<1x32xf32>
      %60 = vector.broadcast %58 : vector<1x1xf32> to vector<1x32xf32>
      %61 = arith.divf %59, %60 : vector<1x32xf32>
      %c0_37 = arith.constant 0 : index
      %c0_38 = arith.constant 0 : index
      %62 = vector.load %arg5[%c0_37, %c0_38] : memref<1x32xf32, #tpu.memory_space<vmem>>, vector<1x32xf32>
      %63 = arith.mulf %61, %62 : vector<1x32xf32>
      %cst_39 = arith.constant dense<0.000000e+00> : vector<1xf32>
      %64 = vector.multi_reduction <add>, %63, %cst_39 [1] : vector<1x32xf32> to vector<1xf32>
      %65 = vector.shape_cast %64 : vector<1xf32> to vector<1x1xf32>
      %c0_40 = arith.constant 0 : index
      %66 = memref.load %arg6[%c0_40] : memref<1xf32, #tpu.memory_space<smem>>
      %67 = vector.broadcast %66 : f32 to vector<1x1xf32>
      %68 = arith.addf %65, %67 : vector<1x1xf32>
      %69 = arith.negf %68 : vector<1x1xf32>
      %70 = math.exp %69 : vector<1x1xf32>
      %cst_41 = arith.constant 1.000000e+00 : f32
      %71 = vector.broadcast %cst_41 : f32 to vector<1x1xf32>
      %72 = arith.addf %71, %70 : vector<1x1xf32>
      %73 = arith.divf %71, %72 : vector<1x1xf32>
      %c0_42 = arith.constant 0 : index
      %c0_43 = arith.constant 0 : index
      %74 = vector.load %arg7[%c0_42, %c0_43] : memref<1x1xf32, #tpu.memory_space<vmem>>, vector<1x1xf32>
      tpu.vector_store %arg7[%c0_42, %c0_43], %73 {strides = array<i32>} : memref<1x1xf32, #tpu.memory_space<vmem>>, vector<1x1xf32>,
      %cst_44 = arith.constant 5.000000e-01 : f32
      %75 = vector.broadcast %cst_44 : f32 to vector<1x1xf32>
      %76 = arith.cmpf oge, %73, %75 : vector<1x1xf32>
      %77 = arith.extui %76 : vector<1x1xi1> to vector<1x1xi32>
      %78 = arith.sitofp %77 : vector<1x1xi32> to vector<1x1xf32>
      %c0_45 = arith.constant 0 : index
      %c0_46 = arith.constant 0 : index
      %79 = vector.load %arg8[%c0_45, %c0_46] : memref<1x1xf32, #tpu.memory_space<vmem>>, vector<1x1xf32>
      tpu.vector_store %arg8[%c0_45, %c0_46], %78 {strides = array<i32>} : memref<1x1xf32, #tpu.memory_space<vmem>>, vector<1x1xf32>,
      %c0_47 = arith.constant 0 : index
      %c0_48 = arith.constant 0 : index
      %80 = vector.load %arg12[%c0_47, %c0_48] : memref<1x1xf32, #tpu.memory_space<vmem>>, vector<1x1xf32>
      %c0_49 = arith.constant 0 : index
      %c0_50 = arith.constant 0 : index
      %81 = vector.load %arg10[%c0_49, %c0_50] : memref<1x1xf32, #tpu.memory_space<vmem>>, vector<1x1xf32>
      tpu.vector_store %arg10[%c0_49, %c0_50], %80 {strides = array<i32>} : memref<1x1xf32, #tpu.memory_space<vmem>>, vector<1x1xf32>,
      %c0_51 = arith.constant 0 : index
      %c0_52 = arith.constant 0 : index
      %82 = vector.load %arg11[%c0_51, %c0_52] : memref<1x1xf32, #tpu.memory_space<vmem>>, vector<1x1xf32>
      tpu.vector_store %arg11[%c0_51, %c0_52], %58 {strides = array<i32>} : memref<1x1xf32, #tpu.memory_space<vmem>>, vector<1x1xf32>,
    } else {
    }
    return
  }
  func.func @transform_0(%arg0: i32) -> (i32, i32) {
    %c0_i32 = arith.constant 0 : i32
    %c0_i32_0 = arith.constant 0 : i32
    return %arg0, %c0_i32 : i32, i32
  }
  func.func @transform_1(%arg0: i32) -> (i32, i32) {
    %c0_i32 = arith.constant 0 : i32
    %c0_i32_0 = arith.constant 0 : i32
    %c0_i32_1 = arith.constant 0 : i32
    return %c0_i32, %c0_i32_0 : i32, i32
  }
  func.func @transform_2(%arg0: i32) -> (i32, i32) {
    %c0_i32 = arith.constant 0 : i32
    %c0_i32_0 = arith.constant 0 : i32
    %c0_i32_1 = arith.constant 0 : i32
    return %c0_i32, %c0_i32_0 : i32, i32
  }
  func.func @transform_3(%arg0: i32) -> (i32, i32) {
    %c0_i32 = arith.constant 0 : i32
    %c0_i32_0 = arith.constant 0 : i32
    %c0_i32_1 = arith.constant 0 : i32
    return %c0_i32, %c0_i32_0 : i32, i32
  }
  func.func @transform_4(%arg0: i32) -> (i32, i32) {
    %c0_i32 = arith.constant 0 : i32
    %c0_i32_0 = arith.constant 0 : i32
    %c0_i32_1 = arith.constant 0 : i32
    return %c0_i32, %c0_i32_0 : i32, i32
  }
  func.func @transform_5(%arg0: i32) -> i32 {
    %c0_i32 = arith.constant 0 : i32
    %c0_i32_0 = arith.constant 0 : i32
    return %c0_i32 : i32
  }
  func.func @transform_6(%arg0: i32) -> (i32, i32) {
    %c0_i32 = arith.constant 0 : i32
    %c0_i32_0 = arith.constant 0 : i32
    %c0_i32_1 = arith.constant 0 : i32
    return %c0_i32, %c0_i32_0 : i32, i32
  }
  func.func @transform_7(%arg0: i32) -> (i32, i32) {
    %c0_i32 = arith.constant 0 : i32
    %c0_i32_0 = arith.constant 0 : i32
    %c0_i32_1 = arith.constant 0 : i32
    return %c0_i32, %c0_i32_0 : i32, i32
  }
  func.func @transform_8(%arg0: i32) -> (i32, i32) {
    %c0_i32 = arith.constant 0 : i32
    %c0_i32_0 = arith.constant 0 : i32
    return %c0_i32, %arg0 : i32, i32
  }
  func.func @transform_9(%arg0: i32) -> (i32, i32) {
    %c0_i32 = arith.constant 0 : i32
    %c0_i32_0 = arith.constant 0 : i32
    %c0_i32_1 = arith.constant 0 : i32
    return %c0_i32, %c0_i32_0 : i32, i32
  }
  func.func @transform_10(%arg0: i32) -> (i32, i32) {
    %c0_i32 = arith.constant 0 : i32
    %c0_i32_0 = arith.constant 0 : i32
    %c0_i32_1 = arith.constant 0 : i32
    return %c0_i32, %c0_i32_0 : i32, i32
  }
}

</mosaic_0001>

<llo_original>
// kernel: tpu_custom_call.1
$region0: #{tpu_custom_call.1}
  #allocation0 [shape = 'u32[]', space=smem, size = 0x4, offset = 0x4, fixed_abs, tag = 'smem constant byte address 0x4 - core index']
  #allocation1 [shape = 'u32[144,128]{1,0:T(1,128)}', space=vmem, size = 0x12000, scoped, tag = 'internal scratch']
  #allocation2 [shape = 'f32[1,1]{1,0:T(1,128)}', space=vmem, size = 0x200, scoped, tag = 'scratch operand']
  #allocation3 [shape = 'f32[1,1]{1,0:T(1,128)}', space=vmem, size = 0x200, scoped, tag = 'scratch operand']
  #allocation4 [shape = 'f32[1,32]{1,0:T(1,128)}', space=vmem, size = 0x200, scoped, tag = 'scratch operand']
  #allocation5 [shape = 'f32[1]{0:T(128)S(6)}', space=smem, size = 0x200, scoped, tag = 'scoped memory for tpu_custom_call.1']
  %s0 = inlined_call_operand.vmem [shape: bf16[200,32], index: 0, kind: input, shape index: {}]
  %s1 = inlined_call_operand.vmem [shape: bf16[32,16], index: 1, kind: input, shape index: {}]
  %s2 = inlined_call_operand.vmem [shape: f32[1,16], index: 2, kind: input, shape index: {}]
  %s3 = inlined_call_operand.vmem [shape: f32[1,16], index: 3, kind: input, shape index: {}]
  %s4 = inlined_call_operand.vmem [shape: f32[1,32], index: 4, kind: input, shape index: {}]
  %s5 = inlined_call_operand.<no memory space> [shape: f32[1], index: 5, kind: input, shape index: {}]
  %s6 = inlined_call_operand.hbm [shape: f32[1,1], index: 6, kind: output, shape index: {0}]
  %s7 = inlined_call_operand.hbm [shape: f32[1,1], index: 7, kind: output, shape index: {1}]
  %s8 = inlined_call_operand.hbm [shape: f32[1,200], index: 8, kind: output, shape index: {2}]
  %s9 = inlined_call_operand.hbm [shape: f32[1,1], index: 9, kind: output, shape index: {3}]
  %s10 = inlined_call_operand.hbm [shape: f32[1,1], index: 10, kind: output, shape index: {4}]
  %11 = xla_tuple %s6, %s7, %s8, %s9, %s10
  %s12 = sld [smem:[#allocation0]]
  $region97: #{tpu_custom_call.1} parent=0
    _
  %s14 = ssub.s32 1, %s12
  %s15 = scalar_select 0, %s14, %s12
  %16 = sst [smem:[#allocation5]] %s5
  $region1: #{tpu_custom_call.1} parent=0
    #allocation6 [shape = 'u8[512]{0}', space=vmem, size = 0x400, scoped, tag = 'output window, operand 0, single buffered']
    #allocation7 [shape = 's32[2]{0}', space=sflag, size = 0x8, scoped, tag = 'scoped memory for tpu_custom_call.1']
    #allocation8 [shape = 'u8[512]{0}', space=vmem, size = 0x400, scoped, tag = 'output window, operand 1, single buffered']
    #allocation9 [shape = 's32[1]{0}', space=sflag, size = 0x4, scoped, tag = 'scoped memory for tpu_custom_call.1']
    #allocation10 [shape = 'u8[1024]{0}', space=vmem, size = 0x400, scoped, tag = 'output window, operand 2']
    #allocation11 [shape = 'u8[512]{0}', space=vmem, size = 0x400, scoped, tag = 'output window, operand 3, single buffered']
    #allocation12 [shape = 'u8[512]{0}', space=vmem, size = 0x400, scoped, tag = 'output window, operand 4, single buffered']
    #allocation13 [shape = 's32[1]{0}', space=sflag, size = 0x4, scoped, tag = 'scoped memory for tpu_custom_call.1']
    %17 = vsyncpa [#allocation7], 0
    %18 = vsyncpa [#allocation9], 0
    %19 = vsyncpa [#allocation13], 0
    loop: start=0, step=1, limit=4
    $region2: #{tpu_custom_call.1} parent=1 // loop_pre_header
      _
    $region3: #{tpu_custom_call.1} parent=1 // loop_header
      %s21 = sphi 0, %s25
      %p22 = scmp.ge.s32.totalorder %s21, 4
      %s31 = sphi 0, %s33
      %s34 = sphi 0, %s31
      %s35 = sphi 0, %s34
      %s51 = sphi 0, %s35
      %s55 = sphi 0, %s55
      %s57 = sphi 0, %s55
      %s58 = sphi 0, %s57
      %s72 = sphi 0, %s58
      %s76 = sphi 0, %s76
      %s78 = sphi 0, %s76
      %s79 = sphi 0, %s78
      %s93 = sphi 0, %s79
      %s97 = sphi 0, %s97
      %s99 = sphi 0, %s97
      %s100 = sphi 0, %s99
      %s114 = sphi 0, %s100
      %s118 = sphi 0, %s118
      %s120 = sphi 0, %s118
      %s121 = sphi 0, %s120
      %s135 = sphi 0, %s121
      %s139 = sphi 0, %s139
      %s141 = sphi 0, %s139
      %s142 = sphi 0, %s141
      %s156 = sphi 0, %s142
      %s160 = sphi 0, %s160
      %s162 = sphi 0, %s160
      %s163 = sphi 0, %s162
      %s177 = sphi 0, %s163
      %s181 = sphi 0, %s181
      %s183 = sphi 0, %s181
      %s184 = sphi 0, %s183
      %s198 = sphi 0, %s184
      %s204 = sphi 0, %s206
      %s207 = sphi 0, %s204
      %s208 = sphi 0, %s207
      %s224 = sphi 0, %s208
      %s228 = sphi 0, %s228
      %s230 = sphi 0, %s228
      %s231 = sphi 0, %s230
      %s245 = sphi 0, %s231
      %s249 = sphi 0, %s249
      %s251 = sphi 0, %s249
      %s252 = sphi 0, %s251
      %s266 = sphi 0, %s252
    $region4: #{tpu_custom_call.1} parent=1 // loop_header_branch
      %24 = sbr.rel (%p22) target = $region8
    $region5: #{tpu_custom_call.1} parent=1 // loop_body
      %s26 = ssub.s32 %s21, 1
      %s27 = ssub.s32 %s21, 2
      %s28 = sadd.s32 %s21, 1
      %s29 = ssub.s32 %s21, %s28
      %p30 = scmp.eq.s32.totalorder %s29, 0
      %s32 = sadd.s32 %s31, 1
      %s33 = scalar_select %p30, %s31, %s32
      %p36 = pneg %p30
      %p37 = scmp.eq.s32.totalorder %s21, 1
      %p38 = por %p36, %p37
      %p39 = scmp.ne.s32.totalorder %s31, %s34
      %p40 = scmp.eq.s32.totalorder %s21, 0
      %p41 = por %p39, %p40
      %p42 = scmp.ne.s32.totalorder %s31, %s34
      %p43 = scmp.eq.s32.totalorder %s26, 1
      %p44 = por %p42, %p43
      %p45 = scmp.ne.s32.totalorder %s34, %s35
      %p46 = scmp.eq.s32.totalorder %s26, 0
      %p47 = por %p45, %p46
      %p48 = scmp.ne.s32.totalorder %s34, %s35
      %p49 = scmp.eq.s32.totalorder %s27, 1
      %p50 = por %p48, %p49
      %p52 = scmp.ne.s32.totalorder %s35, %s51
      %p53 = scmp.eq.s32.totalorder %s27, 0
      %p54 = por %p52, %p53
      %s56 = sadd.s32 %s55, 1
      %p59 = scmp.eq.s32.totalorder %s21, 1
      %p60 = scmp.ne.s32.totalorder %s55, %s57
      %p61 = scmp.eq.s32.totalorder %s21, 0
      %p62 = por %p60, %p61
      %p63 = scmp.ne.s32.totalorder %s55, %s57
      %p64 = scmp.eq.s32.totalorder %s26, 1
      %p65 = por %p63, %p64
      %p66 = scmp.ne.s32.totalorder %s57, %s58
      %p67 = scmp.eq.s32.totalorder %s26, 0
      %p68 = por %p66, %p67
      %p69 = scmp.ne.s32.totalorder %s57, %s58
      %p70 = scmp.eq.s32.totalorder %s27, 1
      %p71 = por %p69, %p70
      %p73 = scmp.ne.s32.totalorder %s58, %s72
      %p74 = scmp.eq.s32.totalorder %s27, 0
      %p75 = por %p73, %p74
      %s77 = sadd.s32 %s76, 1
      %p80 = scmp.eq.s32.totalorder %s21, 1
      %p81 = scmp.ne.s32.totalorder %s76, %s78
      %p82 = scmp.eq.s32.totalorder %s21, 0
      %p83 = por %p81, %p82
      %p84 = scmp.ne.s32.totalorder %s76, %s78
      %p85 = scmp.eq.s32.totalorder %s26, 1
      %p86 = por %p84, %p85
      %p87 = scmp.ne.s32.totalorder %s78, %s79
      %p88 = scmp.eq.s32.totalorder %s26, 0
      %p89 = por %p87, %p88
      %p90 = scmp.ne.s32.totalorder %s78, %s79
      %p91 = scmp.eq.s32.totalorder %s27, 1
      %p92 = por %p90, %p91
      %p94 = scmp.ne.s32.totalorder %s79, %s93
      %p95 = scmp.eq.s32.totalorder %s27, 0
      %p96 = por %p94, %p95
      %s98 = sadd.s32 %s97, 1
      %p101 = scmp.eq.s32.totalorder %s21, 1
      %p102 = scmp.ne.s32.totalorder %s97, %s99
      %p103 = scmp.eq.s32.totalorder %s21, 0
      %p104 = por %p102, %p103
      %p105 = scmp.ne.s32.totalorder %s97, %s99
      %p106 = scmp.eq.s32.totalorder %s26, 1
      %p107 = por %p105, %p106
      %p108 = scmp.ne.s32.totalorder %s99, %s100
      %p109 = scmp.eq.s32.totalorder %s26, 0
      %p110 = por %p108, %p109
      %p111 = scmp.ne.s32.totalorder %s99, %s100
      %p112 = scmp.eq.s32.totalorder %s27, 1
      %p113 = por %p111, %p112
      %p115 = scmp.ne.s32.totalorder %s100, %s114
      %p116 = scmp.eq.s32.totalorder %s27, 0
      %p117 = por %p115, %p116
      %s119 = sadd.s32 %s118, 1
      %p122 = scmp.eq.s32.totalorder %s21, 1
      %p123 = scmp.ne.s32.totalorder %s118, %s120
      %p124 = scmp.eq.s32.totalorder %s21, 0
      %p125 = por %p123, %p124
      %p126 = scmp.ne.s32.totalorder %s118, %s120
      %p127 = scmp.eq.s32.totalorder %s26, 1
      %p128 = por %p126, %p127
      %p129 = scmp.ne.s32.totalorder %s120, %s121
      %p130 = scmp.eq.s32.totalorder %s26, 0
      %p131 = por %p129, %p130
      %p132 = scmp.ne.s32.totalorder %s120, %s121
      %p133 = scmp.eq.s32.totalorder %s27, 1
      %p134 = por %p132, %p133
      %p136 = scmp.ne.s32.totalorder %s121, %s135
      %p137 = scmp.eq.s32.totalorder %s27, 0
      %p138 = por %p136, %p137
      %s140 = sadd.s32 %s139, 1
      %p143 = scmp.eq.s32.totalorder %s21, 1
      %p144 = scmp.ne.s32.totalorder %s139, %s141
      %p145 = scmp.eq.s32.totalorder %s21, 0
      %p146 = por %p144, %p145
      %p147 = scmp.ne.s32.totalorder %s139, %s141
      %p148 = scmp.eq.s32.totalorder %s26, 1
      %p149 = por %p147, %p148
      %p150 = scmp.ne.s32.totalorder %s141, %s142
      %p151 = scmp.eq.s32.totalorder %s26, 0
      %p152 = por %p150, %p151
      %p153 = scmp.ne.s32.totalorder %s141, %s142
      %p154 = scmp.eq.s32.totalorder %s27, 1
      %p155 = por %p153, %p154
      %p157 = scmp.ne.s32.totalorder %s142, %s156
      %p158 = scmp.eq.s32.totalorder %s27, 0
      %p159 = por %p157, %p158
      %s161 = sadd.s32 %s160, 1
      %p164 = scmp.eq.s32.totalorder %s21, 1
      %p165 = scmp.ne.s32.totalorder %s160, %s162
      %p166 = scmp.eq.s32.totalorder %s21, 0
      %p167 = por %p165, %p166
      %p168 = scmp.ne.s32.totalorder %s160, %s162
      %p169 = scmp.eq.s32.totalorder %s26, 1
      %p170 = por %p168, %p169
      %p171 = scmp.ne.s32.totalorder %s162, %s163
      %p172 = scmp.eq.s32.totalorder %s26, 0
      %p173 = por %p171, %p172
      %p174 = scmp.ne.s32.totalorder %s162, %s163
      %p175 = scmp.eq.s32.totalorder %s27, 1
      %p176 = por %p174, %p175
      %p178 = scmp.ne.s32.totalorder %s163, %s177
      %p179 = scmp.eq.s32.totalorder %s27, 0
      %p180 = por %p178, %p179
      %s182 = sadd.s32 %s181, 1
      %p185 = scmp.eq.s32.totalorder %s21, 1
      %p186 = scmp.ne.s32.totalorder %s181, %s183
      %p187 = scmp.eq.s32.totalorder %s21, 0
      %p188 = por %p186, %p187
      %p189 = scmp.ne.s32.totalorder %s181, %s183
      %p190 = scmp.eq.s32.totalorder %s26, 1
      %p191 = por %p189, %p190
      %p192 = scmp.ne.s32.totalorder %s183, %s184
      %p193 = scmp.eq.s32.totalorder %s26, 0
      %p194 = por %p192, %p193
      %p195 = scmp.ne.s32.totalorder %s183, %s184
      %p196 = scmp.eq.s32.totalorder %s27, 1
      %p197 = por %p195, %p196
      %p199 = scmp.ne.s32.totalorder %s184, %s198
      %p200 = scmp.eq.s32.totalorder %s27, 0
      %p201 = por %p199, %p200
      %s202 = ssub.s32 %s21, %s28
      %p203 = scmp.eq.s32.totalorder %s202, 0
      %s205 = sadd.s32 %s204, 1
      %s206 = scalar_select %p203, %s204, %s205
      %p209 = pneg %p203
      %p210 = scmp.eq.s32.totalorder %s21, 1
      %p211 = por %p209, %p210
      %p212 = scmp.ne.s32.totalorder %s204, %s207
      %p213 = scmp.eq.s32.totalorder %s21, 0
      %p214 = por %p212, %p213
      %p215 = scmp.ne.s32.totalorder %s204, %s207
      %p216 = scmp.eq.s32.totalorder %s26, 1
      %p217 = por %p215, %p216
      %p218 = scmp.ne.s32.totalorder %s207, %s208
      %p219 = scmp.eq.s32.totalorder %s26, 0
      %p220 = por %p218, %p219
      %p221 = scmp.ne.s32.totalorder %s207, %s208
      %p222 = scmp.eq.s32.totalorder %s27, 1
      %p223 = por %p221, %p222
      %p225 = scmp.ne.s32.totalorder %s208, %s224
      %p226 = scmp.eq.s32.totalorder %s27, 0
      %p227 = por %p225, %p226
      %s229 = sadd.s32 %s228, 1
      %p232 = scmp.eq.s32.totalorder %s21, 1
      %p233 = scmp.ne.s32.totalorder %s228, %s230
      %p234 = scmp.eq.s32.totalorder %s21, 0
      %p235 = por %p233, %p234
      %p236 = scmp.ne.s32.totalorder %s228, %s230
      %p237 = scmp.eq.s32.totalorder %s26, 1
      %p238 = por %p236, %p237
      %p239 = scmp.ne.s32.totalorder %s230, %s231
      %p240 = scmp.eq.s32.totalorder %s26, 0
      %p241 = por %p239, %p240
      %p242 = scmp.ne.s32.totalorder %s230, %s231
      %p243 = scmp.eq.s32.totalorder %s27, 1
      %p244 = por %p242, %p243
      %p246 = scmp.ne.s32.totalorder %s231, %s245
      %p247 = scmp.eq.s32.totalorder %s27, 0
      %p248 = por %p246, %p247
      %s250 = sadd.s32 %s249, 1
      %p253 = scmp.eq.s32.totalorder %s21, 1
      %p254 = scmp.ne.s32.totalorder %s249, %s251
      %p255 = scmp.eq.s32.totalorder %s21, 0
      %p256 = por %p254, %p255
      %p257 = scmp.ne.s32.totalorder %s249, %s251
      %p258 = scmp.eq.s32.totalorder %s26, 1
      %p259 = por %p257, %p258
      %p260 = scmp.ne.s32.totalorder %s251, %s252
      %p261 = scmp.eq.s32.totalorder %s26, 0
      %p262 = por %p260, %p261
      %p263 = scmp.ne.s32.totalorder %s251, %s252
      %p264 = scmp.eq.s32.totalorder %s27, 1
      %p265 = por %p263, %p264
      %p267 = scmp.ne.s32.totalorder %s252, %s266
      %p268 = scmp.eq.s32.totalorder %s27, 0
      %p269 = por %p267, %p268
      %p270 = scmp.le.s32.totalorder 1, %s21
      %p271 = scmp.lt.s32.totalorder %s21, 3
      %p272 = pnand %p270, %p271
      %p273 = pneg %p272
      // Predicated region
      $region9: #{tpu_custom_call.1} parent=5 // pred_check
        _
      $region10: #{tpu_custom_call.1} parent=5 // pred_check_branch
        %275 = sbr.rel (%p272) target = $region12
      $region11: #{tpu_custom_call.1} parent=5 // pred_region
        %s276 = ssub.s32 %s21, 1
        // Predicated region
        $region13: #{tpu_custom_call.1} parent=11 // pred_check
          %p277 = pneg %p68
        $region14: #{tpu_custom_call.1} parent=11 // pred_check_branch
          %279 = sbr.rel (%p277) target = $region16
        $region15: #{tpu_custom_call.1} parent=11 // pred_region
          _
        $region16: #{tpu_custom_call.1} parent=11 // pred_fallthru
          _
        // Predicated region
        $region17: #{tpu_custom_call.1} parent=11 // pred_check
          %p280 = pneg %p89
        $region18: #{tpu_custom_call.1} parent=11 // pred_check_branch
          %282 = sbr.rel (%p280) target = $region20
        $region19: #{tpu_custom_call.1} parent=11 // pred_region
          _
        $region20: #{tpu_custom_call.1} parent=11 // pred_fallthru
          _
        // Predicated region
        $region21: #{tpu_custom_call.1} parent=11 // pred_check
          %p283 = pneg %p110
        $region22: #{tpu_custom_call.1} parent=11 // pred_check_branch
          %285 = sbr.rel (%p283) target = $region24
        $region23: #{tpu_custom_call.1} parent=11 // pred_region
          _
        $region24: #{tpu_custom_call.1} parent=11 // pred_fallthru
          _
        // Predicated region
        $region25: #{tpu_custom_call.1} parent=11 // pred_check
          %p286 = pneg %p131
        $region26: #{tpu_custom_call.1} parent=11 // pred_check_branch
          %288 = sbr.rel (%p286) target = $region28
        $region27: #{tpu_custom_call.1} parent=11 // pred_region
          _
        $region28: #{tpu_custom_call.1} parent=11 // pred_fallthru
          _
        // Predicated region
        $region29: #{tpu_custom_call.1} parent=11 // pred_check
          %p289 = pneg %p152
        $region30: #{tpu_custom_call.1} parent=11 // pred_check_branch
          %291 = sbr.rel (%p289) target = $region32
        $region31: #{tpu_custom_call.1} parent=11 // pred_region
          _
        $region32: #{tpu_custom_call.1} parent=11 // pred_fallthru
          _
      $region12: #{tpu_custom_call.1} parent=5 // pred_fallthru
        _
      %p292 = scmp.lt.s32.totalorder %s21, 2
      // Predicated region
      $region33: #{tpu_custom_call.1} parent=5 // pred_check
        %p293 = pneg %p292
      $region34: #{tpu_custom_call.1} parent=5 // pred_check_branch
        %295 = sbr.rel (%p293) target = $region36
      $region35: #{tpu_custom_call.1} parent=5 // pred_region
        // Predicated region
        $region37: #{tpu_custom_call.1} parent=35 // pred_check
          %p296 = pneg %p41
        $region38: #{tpu_custom_call.1} parent=35 // pred_check_branch
          %298 = sbr.rel (%p296) target = $region40
        $region39: #{tpu_custom_call.1} parent=35 // pred_region
          %s299 = smul.u32 16, %s21
          %s300 = ssub.s32 25, %s299
          %p301 = scmp.lt.s32.totalorder %s300, 16
          %s302 = scalar_select %p301, %s300, 16
          %s303 = smul.u32 64, %s302
          %p304 = scmp.lt.s32.totalorder %s299, 24
          %s305 = scalar_select %p304, %s299, 24
          %s306 = smul.addr %s305, 4
          %s307 = scalar_lea.vmem %s0, %s306
          %s308 = smul.u32 16, %s21
          %s309 = ssub.s32 25, %s308
          %p310 = scmp.lt.s32.totalorder %s309, 16
          %s311 = scalar_select %p310, %s309, 16
          %s312 = smul.u32 64, %s311
        $region40: #{tpu_custom_call.1} parent=35 // pred_fallthru
          _
      $region36: #{tpu_custom_call.1} parent=5 // pred_fallthru
        _
      %p313 = scmp.le.s32.totalorder 1, %s21
      %p314 = scmp.lt.s32.totalorder %s21, 3
      %p315 = pnand %p313, %p314
      %p316 = pneg %p315
      // Predicated region
      $region41: #{tpu_custom_call.1} parent=5 // pred_check
        _
      $region42: #{tpu_custom_call.1} parent=5 // pred_check_branch
        %318 = sbr.rel (%p315) target = $region44
      $region43: #{tpu_custom_call.1} parent=5 // pred_region
        %s319 = ssub.s32 %s21, 1
        %s320 = smul.u32 16, %s26
        %s321 = ssub.s32 25, %s320
        %p322 = scmp.lt.s32.totalorder %s321, 16
        %s323 = scalar_select %p322, %s321, 16
        %s324 = smul.u32 64, %s323
        %p325 = scmp.lt.s32.totalorder %s320, 24
        %s326 = scalar_select %p325, %s320, 24
        %s327 = smul.addr %s326, 4
        %s328 = scalar_lea.vmem %s0, %s327
        %p329 = pneg %p47
        %p330 = pneg %p44
        %p331 = pneg %p68
        %p332 = pneg %p65
        %p333 = pneg %p89
        %p334 = pneg %p86
        %p335 = pneg %p110
        %p336 = pneg %p107
        %p337 = pneg %p131
        %p338 = pneg %p128
        %p339 = pneg %p152
        %p340 = pneg %p149
        %p341 = pneg %p173
        %p342 = pneg %p170
        %p343 = pneg %p194
        %p344 = pneg %p191
        %p345 = pneg %p220
        %p346 = pneg %p217
        %s347 = sand.u32 %s26, 1
        %s348 = scalar_lea.sflag [#allocation7], %s347
        %s349 = sand.u32 %s207, 1
        %s350 = scalar_lea.vmem [#allocation10], %s349
        %p351 = pneg %p241
        %p352 = pneg %p238
        %p353 = pneg %p262
        %p354 = pneg %p259
        %s355 = smul.u32 16, %s26
        %s356 = ssub.s32 25, %s355
        %p357 = scmp.lt.s32.totalorder %s356, 16
        %s358 = scalar_select %p357, %s356, 16
        %s359 = smul.u32 64, %s358
        %p360 = scmp.lt.s32.totalorder %s355, 24
        %s361 = scalar_select %p360, %s355, 24
        %s362 = smul.addr %s361, 4
        %s363 = scalar_lea.vmem %s0, %s362
        %s364 = smul.u32 16, %s26
        %s365 = ssub.s32 25, %s364
        %p366 = scmp.lt.s32.totalorder %s365, 16
        %s367 = scalar_select %p366, %s365, 16
        %s368 = smul.u32 64, %s367
        %p370 = scmp.eq.s32.totalorder %s26, 0
        // Predicated region
        $region45: #{tpu_custom_call.1} parent=43 // pred_check
          %p371 = pneg %p370
        $region46: #{tpu_custom_call.1} parent=43 // pred_check_branch
          %373 = sbr.rel (%p371) target = $region48
        $region47: #{tpu_custom_call.1} parent=43 // pred_region
          %vm374 = vcmask 0
          %375 = vst.msk [vmem:[#allocation2] sm:$0x1] %vm374, -1e+30
          %376 = vst.msk [vmem:[#allocation3] sm:$0x1] %vm374, 0.0
          %vm377 = vcmask 253952
          %378 = vst.msk [vmem:[#allocation4] sm:$0x1] %vm377, 0.0
        $region48: #{tpu_custom_call.1} parent=43 // pred_fallthru
          _
        %v379 = vld [vmem:[%s363] sm:$0xf]
        %v380 = vld [vmem:[%s363 + $0x4] sm:$0xf]
        %v381 = vld [vmem:[%s363 + $0x8] sm:$0xf]
        %v382 = vld [vmem:[%s363 + $0xc] sm:$0xf]
        %v383 = vld [vmem:[%s363 + $0x10] sm:$0xf]
        %v384 = vld [vmem:[%s363 + $0x14] sm:$0xf]
        %v385 = vld [vmem:[%s363 + $0x18] sm:$0xf]
        %v386 = vld [vmem:[%s363 + $0x1c] sm:$0xf]
        %v387 = vld [vmem:[%s363 + $0x20] sm:$0xf]
        %v388 = vld [vmem:[%s363 + $0x24] sm:$0xf]
        %v389 = vld [vmem:[%s363 + $0x28] sm:$0xf]
        %v390 = vld [vmem:[%s363 + $0x2c] sm:$0xf]
        %v391 = vld [vmem:[%s363 + $0x30] sm:$0xf]
        %v392 = vld [vmem:[%s363 + $0x34] sm:$0xf]
        %v393 = vld [vmem:[%s363 + $0x38] sm:$0xf]
        %v394 = vld [vmem:[%s363 + $0x3c] sm:$0xf]
        %v395 = vlaneseq
        %v396 = vshrl.u32 %v395, 7
        %v397 = vadd.s32 %v396, 8
        %v398 = vadd.s32 %v396, 16
        %v399 = vadd.s32 %v396, 24
        %v400 = vadd.s32 %v396, 32
        %v401 = vadd.s32 %v396, 40
        %v402 = vadd.s32 %v396, 48
        %v403 = vadd.s32 %v396, 56
        %v404 = vadd.s32 %v396, 64
        %v405 = vadd.s32 %v396, 72
        %v406 = vadd.s32 %v396, 80
        %v407 = vadd.s32 %v396, 88
        %v408 = vadd.s32 %v396, 96
        %v409 = vadd.s32 %v396, 104
        %v410 = vadd.s32 %v396, 112
        %v411 = vadd.s32 %v396, 120
        %s412 = smul.u32 %s26, 128
        %v413 = vstv %s412
        %v414 = vadd.s32 %v396, %v413
        %v415 = vadd.s32 %v397, %v413
        %v416 = vadd.s32 %v398, %v413
        %v417 = vadd.s32 %v399, %v413
        %v418 = vadd.s32 %v400, %v413
        %v419 = vadd.s32 %v401, %v413
        %v420 = vadd.s32 %v402, %v413
        %v421 = vadd.s32 %v403, %v413
        %v422 = vadd.s32 %v404, %v413
        %v423 = vadd.s32 %v405, %v413
        %v424 = vadd.s32 %v406, %v413
        %v425 = vadd.s32 %v407, %v413
        %v426 = vadd.s32 %v408, %v413
        %v427 = vadd.s32 %v409, %v413
        %v428 = vadd.s32 %v410, %v413
        %v429 = vadd.s32 %v411, %v413
        %vm430 = vcmp.lt.s32.totalorder %v414, 200
        %vm431 = vcmp.lt.s32.totalorder %v415, 200
        %vm432 = vcmp.lt.s32.totalorder %v416, 200
        %vm433 = vcmp.lt.s32.totalorder %v417, 200
        %vm434 = vcmp.lt.s32.totalorder %v418, 200
        %vm435 = vcmp.lt.s32.totalorder %v419, 200
        %vm436 = vcmp.lt.s32.totalorder %v420, 200
        %vm437 = vcmp.lt.s32.totalorder %v421, 200
        %vm438 = vcmp.lt.s32.totalorder %v422, 200
        %vm439 = vcmp.lt.s32.totalorder %v423, 200
        %vm440 = vcmp.lt.s32.totalorder %v424, 200
        %vm441 = vcmp.lt.s32.totalorder %v425, 200
        %vm442 = vcmp.lt.s32.totalorder %v426, 200
        %vm443 = vcmp.lt.s32.totalorder %v427, 200
        %vm444 = vcmp.lt.s32.totalorder %v428, 200
        %vm445 = vcmp.lt.s32.totalorder %v429, 200
        %v446 = vsel %vm430, 1, 0
        %v447 = vsel %vm431, 1, 0
        %v448 = vsel %vm432, 1, 0
        %v449 = vsel %vm433, 1, 0
        %v450 = vsel %vm434, 1, 0
        %v451 = vsel %vm435, 1, 0
        %v452 = vsel %vm436, 1, 0
        %v453 = vsel %vm437, 1, 0
        %v454 = vsel %vm438, 1, 0
        %v455 = vsel %vm439, 1, 0
        %v456 = vsel %vm440, 1, 0
        %v457 = vsel %vm441, 1, 0
        %v458 = vsel %vm442, 1, 0
        %v459 = vsel %vm443, 1, 0
        %v460 = vsel %vm444, 1, 0
        %v461 = vsel %vm445, 1, 0
        %vm462 = vcmp.eq.s32.totalorder %v446, 1
        %vm463 = vcmp.eq.s32.totalorder %v447, 1
        %vm464 = vcmp.eq.s32.totalorder %v448, 1
        %vm465 = vcmp.eq.s32.totalorder %v449, 1
        %vm466 = vcmp.eq.s32.totalorder %v450, 1
        %vm467 = vcmp.eq.s32.totalorder %v451, 1
        %vm468 = vcmp.eq.s32.totalorder %v452, 1
        %vm469 = vcmp.eq.s32.totalorder %v453, 1
        %vm470 = vcmp.eq.s32.totalorder %v454, 1
        %vm471 = vcmp.eq.s32.totalorder %v455, 1
        %vm472 = vcmp.eq.s32.totalorder %v456, 1
        %vm473 = vcmp.eq.s32.totalorder %v457, 1
        %vm474 = vcmp.eq.s32.totalorder %v458, 1
        %vm475 = vcmp.eq.s32.totalorder %v459, 1
        %vm476 = vcmp.eq.s32.totalorder %v460, 1
        %vm477 = vcmp.eq.s32.totalorder %v461, 1
        %vm478 = vmpackc.low %vm462, %vm462
        %vm479 = vmpackc.low %vm463, %vm463
        %vm480 = vmpackc.low %vm464, %vm464
        %vm481 = vmpackc.low %vm465, %vm465
        %vm482 = vmpackc.low %vm466, %vm466
        %vm483 = vmpackc.low %vm467, %vm467
        %vm484 = vmpackc.low %vm468, %vm468
        %vm485 = vmpackc.low %vm469, %vm469
        %vm486 = vmpackc.low %vm470, %vm470
        %vm487 = vmpackc.low %vm471, %vm471
        %vm488 = vmpackc.low %vm472, %vm472
        %vm489 = vmpackc.low %vm473, %vm473
        %vm490 = vmpackc.low %vm474, %vm474
        %vm491 = vmpackc.low %vm475, %vm475
        %vm492 = vmpackc.low %vm476, %vm476
        %vm493 = vmpackc.low %vm477, %vm477
        %v494 = vsel %vm478, %v379, 0
        %v495 = vsel %vm479, %v380, 0
        %v496 = vsel %vm480, %v381, 0
        %v497 = vsel %vm481, %v382, 0
        %v498 = vsel %vm482, %v383, 0
        %v499 = vsel %vm483, %v384, 0
        %v500 = vsel %vm484, %v385, 0
        %v501 = vsel %vm485, %v386, 0
        %v502 = vsel %vm486, %v387, 0
        %v503 = vsel %vm487, %v388, 0
        %v504 = vsel %vm488, %v389, 0
        %v505 = vsel %vm489, %v390, 0
        %v506 = vsel %vm490, %v391, 0
        %v507 = vsel %vm491, %v392, 0
        %v508 = vsel %vm492, %v393, 0
        %v509 = vsel %vm493, %v394, 0
        %v510 = vld [vmem:[%s1] sm:$0xf]
        %v511 = vld [vmem:[%s1 + $0x4] sm:$0xf]
        %v512 = vld [vmem:[%s1 + $0x8] sm:$0xf]
        %v513 = vld [vmem:[%s1 + $0xc] sm:$0xf]
        %v514 = vld [vmem:[%s2] sm:$0x1]
        %v516 = vlaneseq
        %v517 = vshrl.u32 %v516, 7
        %v518 = vsub.s32 0, %v517
        %v519 = vrot.slane %v514, %v518
        %v537 = vunpack.c.l.b16 %v494
        %v538 = vunpack.c.l.b16 %v495
        %v539 = vunpack.c.l.b16 %v496
        %v540 = vunpack.c.l.b16 %v497
        %v541 = vunpack.c.l.b16 %v498
        %v542 = vunpack.c.l.b16 %v499
        %v543 = vunpack.c.l.b16 %v500
        %v544 = vunpack.c.l.b16 %v501
        %v545 = vunpack.c.l.b16 %v502
        %v546 = vunpack.c.l.b16 %v503
        %v547 = vunpack.c.l.b16 %v504
        %v548 = vunpack.c.l.b16 %v505
        %v549 = vunpack.c.l.b16 %v506
        %v550 = vunpack.c.l.b16 %v507
        %v551 = vunpack.c.l.b16 %v508
        %v552 = vunpack.c.l.b16 %v509
        %v553 = vpack.c.b16 %v538, %v537
        %v554 = vpack.c.b16 %v540, %v539
        %v555 = vpack.c.b16 %v542, %v541
        %v556 = vpack.c.b16 %v544, %v543
        %v557 = vpack.c.b16 %v546, %v545
        %v558 = vpack.c.b16 %v548, %v547
        %v559 = vpack.c.b16 %v550, %v549
        %v560 = vpack.c.b16 %v552, %v551
        %v565 = vunpack.c.l.b16 %v510
        %v566 = vunpack.c.l.b16 %v511
        %v567 = vunpack.c.l.b16 %v512
        %v568 = vunpack.c.l.b16 %v513
        %v569 = vpack.c.b16 %v566, %v565
        %v570 = vpack.c.b16 %v568, %v567
        %vm573 = vcmask 261120
        %v575 = vsel %vm573, %v553, 0
        %v578 = vsel %vm573, %v554, 0
        %v581 = vsel %vm573, %v555, 0
        %v584 = vsel %vm573, %v556, 0
        %v587 = vsel %vm573, %v557, 0
        %v590 = vsel %vm573, %v558, 0
        %v593 = vsel %vm573, %v559, 0
        %v596 = vsel %vm573, %v560, 0
        %598 = vmatprep.subr.bf16.mxu0 0
        %599 = vmatpush1.bf16.msra.mxu0 %v569
        %600 = vmatprep.subr.bf16.mxu0 0
        %601 = vmatpush1.bf16.msra.mxu0 %v570
        %602 = vmatprep.subr.bf16.mxu0 0
        %603 = vmatpush1.bf16.msra.mxu0 0
        %604 = vmatprep.subr.bf16.mxu0 0
        %605 = vmatpush1.bf16.msra.mxu0 0
        %606 = vmatprep.subr.bf16.mxu0 0
        %607 = vmatpush1.bf16.msra.mxu0 0
        %608 = vmatprep.subr.bf16.mxu0 0
        %609 = vmatpush1.bf16.msra.mxu0 0
        %610 = vmatprep.subr.bf16.mxu0 0
        %611 = vmatpush1.bf16.msra.mxu0 0
        %612 = vmatprep.subr.bf16.mxu0 0
        %613 = vmatpush1.bf16.msra.mxu0 0
        %614 = vmatprep.subr.bf16.mxu0 0
        %615 = vmatpush1.bf16.msra.mxu0 0
        %616 = vmatprep.subr.bf16.mxu0 0
        %617 = vmatpush1.bf16.msra.mxu0 0
        %618 = vmatprep.subr.bf16.mxu0 0
        %619 = vmatpush1.bf16.msra.mxu0 0
        %620 = vmatprep.subr.bf16.mxu0 0
        %621 = vmatpush1.bf16.msra.mxu0 0
        %622 = vmatprep.subr.bf16.mxu0 0
        %623 = vmatpush1.bf16.msra.mxu0 0
        %624 = vmatprep.subr.bf16.mxu0 0
        %625 = vmatpush1.bf16.msra.mxu0 0
        %626 = vmatprep.subr.bf16.mxu0 0
        %627 = vmatpush1.bf16.msra.mxu0 0
        %628 = vmatprep.subr.bf16.mxu0 0
        %629 = vmatpush1.bf16.msra.mxu0 0
        %630 = vmatprep.mubr.bf16.mxu0 0
        %631 = vmatmul.mubr.bf16.gmra.mrb[0].mxu0 %v575
        %v632 = vpop.f32.mrb[0].mxu0
        %v633 = vadd.f32 %v519, %v632
        %v634 = vpop.f32.mrb[0].mxu0
        %v635 = vpop.f32.mrb[0].mxu0
        %v636 = vadd.f32 %v519, %v635
        %v637 = vpop.f32.mrb[0].mxu0
        %638 = vmatprep.mubr.bf16.mxu0 0
        %639 = vmatmul.mubr.bf16.gmra.mrb[0].mxu0 %v578
        %v640 = vpop.f32.mrb[0].mxu0
        %v641 = vadd.f32 %v519, %v640
        %v642 = vpop.f32.mrb[0].mxu0
        %v643 = vpop.f32.mrb[0].mxu0
        %v644 = vadd.f32 %v519, %v643
        %v645 = vpop.f32.mrb[0].mxu0
        %646 = vmatprep.mubr.bf16.mxu0 0
        %647 = vmatmul.mubr.bf16.gmra.mrb[0].mxu0 %v581
        %v648 = vpop.f32.mrb[0].mxu0
        %v649 = vadd.f32 %v519, %v648
        %v650 = vpop.f32.mrb[0].mxu0
        %v651 = vpop.f32.mrb[0].mxu0
        %v652 = vadd.f32 %v519, %v651
        %v653 = vpop.f32.mrb[0].mxu0
        %654 = vmatprep.mubr.bf16.mxu0 0
        %655 = vmatmul.mubr.bf16.gmra.mrb[0].mxu0 %v584
        %v656 = vpop.f32.mrb[0].mxu0
        %v657 = vadd.f32 %v519, %v656
        %v658 = vpop.f32.mrb[0].mxu0
        %v659 = vpop.f32.mrb[0].mxu0
        %v660 = vadd.f32 %v519, %v659
        %v661 = vpop.f32.mrb[0].mxu0
        %662 = vmatprep.mubr.bf16.mxu0 0
        %663 = vmatmul.mubr.bf16.gmra.mrb[0].mxu0 %v587
        %v664 = vpop.f32.mrb[0].mxu0
        %v665 = vadd.f32 %v519, %v664
        %v666 = vpop.f32.mrb[0].mxu0
        %v667 = vpop.f32.mrb[0].mxu0
        %v668 = vadd.f32 %v519, %v667
        %v669 = vpop.f32.mrb[0].mxu0
        %670 = vmatprep.mubr.bf16.mxu0 0
        %671 = vmatmul.mubr.bf16.gmra.mrb[0].mxu0 %v590
        %v672 = vpop.f32.mrb[0].mxu0
        %v673 = vadd.f32 %v519, %v672
        %v674 = vpop.f32.mrb[0].mxu0
        %v675 = vpop.f32.mrb[0].mxu0
        %v676 = vadd.f32 %v519, %v675
        %v677 = vpop.f32.mrb[0].mxu0
        %678 = vmatprep.mubr.bf16.mxu0 0
        %679 = vmatmul.mubr.bf16.gmra.mrb[0].mxu0 %v593
        %v680 = vpop.f32.mrb[0].mxu0
        %v681 = vadd.f32 %v519, %v680
        %v682 = vpop.f32.mrb[0].mxu0
        %v683 = vpop.f32.mrb[0].mxu0
        %v684 = vadd.f32 %v519, %v683
        %v685 = vpop.f32.mrb[0].mxu0
        %686 = vmatprep.mubr.bf16.mxu0 0
        %687 = vmatmul.mubr.bf16.gmra.mrb[0].mxu0 %v596
        %v688 = vpop.f32.mrb[0].mxu0
        %v689 = vadd.f32 %v519, %v688
        %v690 = vpop.f32.mrb[0].mxu0
        %v691 = vpop.f32.mrb[0].mxu0
        %v692 = vadd.f32 %v519, %v691
        %v693 = vpop.f32.mrb[0].mxu0
        %694 = vdwg.mxu0
        %v695 = vtanh.pop %v633
        %v696 = vtanh.pop %v636
        %v697 = vtanh.pop %v641
        %v698 = vtanh.pop %v644
        %v699 = vtanh.pop %v649
        %v700 = vtanh.pop %v652
        %v701 = vtanh.pop %v657
        %v702 = vtanh.pop %v660
        %v703 = vtanh.pop %v665
        %v704 = vtanh.pop %v668
        %v705 = vtanh.pop %v673
        %v706 = vtanh.pop %v676
        %v707 = vtanh.pop %v681
        %v708 = vtanh.pop %v684
        %v709 = vtanh.pop %v689
        %v710 = vtanh.pop %v692
        %v711 = vld [vmem:[%s3] sm:$0x1]
        %vm712 = vcmask 130048
        %v714 = vsel %vm712, %v711, 0
        %v717 = vsel %vm712, %v695, 0
        %v720 = vsel %vm712, %v696, 0
        %v723 = vsel %vm712, %v697, 0
        %v726 = vsel %vm712, %v698, 0
        %v729 = vsel %vm712, %v699, 0
        %v732 = vsel %vm712, %v700, 0
        %v735 = vsel %vm712, %v701, 0
        %v738 = vsel %vm712, %v702, 0
        %v741 = vsel %vm712, %v703, 0
        %v744 = vsel %vm712, %v704, 0
        %v747 = vsel %vm712, %v705, 0
        %v750 = vsel %vm712, %v706, 0
        %v753 = vsel %vm712, %v707, 0
        %v756 = vsel %vm712, %v708, 0
        %v759 = vsel %vm712, %v709, 0
        %v762 = vsel %vm712, %v710, 0
        %764 = vmatprep.subr.mxu0 0.0
        %765 = vmatpush1.xpose.msra.mxu0 %v717
        %766 = vmatprep.subr.mxu0 0.0
        %767 = vmatpush1.xpose.msra.mxu0 %v720
        %768 = vmatprep.subr.mxu0 0.0
        %769 = vmatpush1.xpose.msra.mxu0 %v723
        %770 = vmatprep.subr.mxu0 0.0
        %771 = vmatpush1.xpose.msra.mxu0 %v726
        %772 = vmatprep.subr.mxu0 0.0
        %773 = vmatpush1.xpose.msra.mxu0 %v729
        %774 = vmatprep.subr.mxu0 0.0
        %775 = vmatpush1.xpose.msra.mxu0 %v732
        %776 = vmatprep.subr.mxu0 0.0
        %777 = vmatpush1.xpose.msra.mxu0 %v735
        %778 = vmatprep.subr.mxu0 0.0
        %779 = vmatpush1.xpose.msra.mxu0 %v738
        %780 = vmatprep.subr.mxu0 0.0
        %781 = vmatpush1.xpose.msra.mxu0 %v741
        %782 = vmatprep.subr.mxu0 0.0
        %783 = vmatpush1.xpose.msra.mxu0 %v744
        %784 = vmatprep.subr.mxu0 0.0
        %785 = vmatpush1.xpose.msra.mxu0 %v747
        %786 = vmatprep.subr.mxu0 0.0
        %787 = vmatpush1.xpose.msra.mxu0 %v750
        %788 = vmatprep.subr.mxu0 0.0
        %789 = vmatpush1.xpose.msra.mxu0 %v753
        %790 = vmatprep.subr.mxu0 0.0
        %791 = vmatpush1.xpose.msra.mxu0 %v756
        %792 = vmatprep.subr.mxu0 0.0
        %793 = vmatpush1.xpose.msra.mxu0 %v759
        %794 = vmatprep.subr.mxu0 0.0
        %795 = vmatpush1.xpose.msra.mxu0 %v762
        %796 = vmatprep.subr.mxu0 0.0
        %797 = vmatpush1.xpose.msra.mxu0 0.0
        %798 = vmatprep.subr.mxu0 0.0
        %799 = vmatpush1.xpose.msra.mxu0 0.0
        %800 = vmatprep.subr.mxu0 0.0
        %801 = vmatpush1.xpose.msra.mxu0 0.0
        %802 = vmatprep.subr.mxu0 0.0
        %803 = vmatpush1.xpose.msra.mxu0 0.0
        %804 = vmatprep.subr.mxu0 0.0
        %805 = vmatpush1.xpose.msra.mxu0 0.0
        %806 = vmatprep.subr.mxu0 0.0
        %807 = vmatpush1.xpose.msra.mxu0 0.0
        %808 = vmatprep.subr.mxu0 0.0
        %809 = vmatpush1.xpose.msra.mxu0 0.0
        %810 = vmatprep.subr.mxu0 0.0
        %811 = vmatpush1.xpose.msra.mxu0 0.0
        %812 = vmatprep.subr.mxu0 0.0
        %813 = vmatpush1.xpose.msra.mxu0 0.0
        %814 = vmatprep.subr.mxu0 0.0
        %815 = vmatpush1.xpose.msra.mxu0 0.0
        %816 = vmatprep.subr.mxu0 0.0
        %817 = vmatpush1.xpose.msra.mxu0 0.0
        %818 = vmatprep.subr.mxu0 0.0
        %819 = vmatpush1.xpose.msra.mxu0 0.0
        %820 = vmatprep.subr.mxu0 0.0
        %821 = vmatpush1.xpose.msra.mxu0 0.0
        %822 = vmatprep.subr.mxu0 0.0
        %823 = vmatpush1.xpose.msra.mxu0 0.0
        %824 = vmatprep.subr.mxu0 0.0
        %825 = vmatpush1.xpose.msra.mxu0 0.0
        %826 = vmatprep.subr.mxu0 0.0
        %827 = vmatpush1.xpose.msra.mxu0 0.0
        %828 = vmatprep.mubr.f32.mxu0 0.0
        %829 = vmatmul.mubr.f32.gmra.mrb[0].mxu0 %v714
        %v830 = vpop.f32.mrb[0].mxu0
        %v831 = vadd.f32 0.0, %v830
        %v832 = vpop.f32.mrb[0].mxu0
        %833 = vdwg.mxu0
        %v834 = vlaneseq
        %v835 = vand.u32 %v834, 127
        %v836 = vadd.s32 %v835, %v413
        %vm837 = vcmp.lt.s32.totalorder %v836, 200
        %v838 = vsel %vm837, %v831, -1e+30
        %839 = vst [vmem:[%s350] sm:$0x1] %v838
        %v840 = vld [vmem:[#allocation2] sm:$0x1]
        %vm841 = vcmask 1040384
        %v842 = vsel %vm841, %v838, -inf
        %843 = vmax.xlane.f32.xlu0 %v842
        %v844 = vpop.xlane.xlu0 %843
        %v845 = vmax.f32 %v840, %v844
        %v846 = vsub.f32 %v840, %v845
        %v847 = vmul.f32 %v846, 1.442695
        %v848 = vpow.pop %v847
        %850 = vset.pattern.permute.xlu0 0
        %851 = vperm.xlu0 %850, %v845
        %v852 = vpop.permute.xlu0 %851
        %v854 = vlaneseq
        %v855 = vshrl.u32 %v854, 7
        %v856 = vsub.s32 0, %v855
        %v857 = vrot.slane %v852, %v856
        %v858 = vsub.f32 %v838, %v857
        %v859 = vmul.f32 %v858, 1.442695
        %v860 = vpow.pop %v859
        %v861 = vld [vmem:[#allocation3] sm:$0x1]
        %v862 = vmul.f32 %v848, %v861
        %v863 = vsel %vm841, %v860, 0.0
        %864 = vadd.xlane.f32.xlu0 %v863
        %v865 = vpop.xlane.xlu0 %864
        %v866 = vadd.f32 %v862, %v865
        %vm867 = vcmask 0
        %868 = vst.msk [vmem:[#allocation3] sm:$0x1] %vm867, %v866
        %v869 = vld [vmem:[#allocation4] sm:$0x1]
        %871 = vset.pattern.permute.xlu0 0
        %872 = vperm.xlu0 %871, %v848
        %v873 = vpop.permute.xlu0 %872
        %v875 = vlaneseq
        %v876 = vshrl.u32 %v875, 7
        %v877 = vsub.s32 0, %v876
        %v878 = vrot.slane %v873, %v877
        %v879 = vmul.f32 %v878, %v869
        %v880 = vpack.c.bf16 %v860, %v860
        %889 = vmatprep.subr.bf16.mxu0 0
        %890 = vmatpush1.bf16.msra.mxu0 %v553
        %891 = vmatprep.subr.bf16.mxu0 0
        %892 = vmatpush1.bf16.msra.mxu0 %v554
        %893 = vmatprep.subr.bf16.mxu0 0
        %894 = vmatpush1.bf16.msra.mxu0 %v555
        %895 = vmatprep.subr.bf16.mxu0 0
        %896 = vmatpush1.bf16.msra.mxu0 %v556
        %897 = vmatprep.subr.bf16.mxu0 0
        %898 = vmatpush1.bf16.msra.mxu0 %v557
        %899 = vmatprep.subr.bf16.mxu0 0
        %900 = vmatpush1.bf16.msra.mxu0 %v558
        %901 = vmatprep.subr.bf16.mxu0 0
        %902 = vmatpush1.bf16.msra.mxu0 %v559
        %903 = vmatprep.subr.bf16.mxu0 0
        %904 = vmatpush1.bf16.msra.mxu0 %v560
        %905 = vmatprep.subr.bf16.mxu0 0
        %906 = vmatpush1.bf16.msra.mxu0 0
        %907 = vmatprep.subr.bf16.mxu0 0
        %908 = vmatpush1.bf16.msra.mxu0 0
        %909 = vmatprep.subr.bf16.mxu0 0
        %910 = vmatpush1.bf16.msra.mxu0 0
        %911 = vmatprep.subr.bf16.mxu0 0
        %912 = vmatpush1.bf16.msra.mxu0 0
        %913 = vmatprep.subr.bf16.mxu0 0
        %914 = vmatpush1.bf16.msra.mxu0 0
        %915 = vmatprep.subr.bf16.mxu0 0
        %916 = vmatpush1.bf16.msra.mxu0 0
        %917 = vmatprep.subr.bf16.mxu0 0
        %918 = vmatpush1.bf16.msra.mxu0 0
        %919 = vmatprep.subr.bf16.mxu0 0
        %920 = vmatpush1.bf16.msra.mxu0 0
        %921 = vmatprep.mubr.bf16.mxu0 0
        %922 = vmatmul.mubr.bf16.gmra.mrb[0].mxu0 %v880
        %v923 = vpop.f32.mrb[0].mxu0
        %v924 = vadd.f32 0.0, %v923
        %v925 = vpop.f32.mrb[0].mxu0
        %v926 = vpop.f32.mrb[0].mxu0
        %v927 = vpop.f32.mrb[0].mxu0
        %928 = vdwg.mxu0
        %v929 = vadd.f32 %v879, %v924
        %vm930 = vcmask 253952
        %931 = vst.msk [vmem:[#allocation4] sm:$0x1] %vm930, %v929
        %932 = vst.msk [vmem:[#allocation2] sm:$0x1] %vm867, %v845
        %p933 = scmp.eq.s32.totalorder %s26, 1
        // Predicated region
        $region49: #{tpu_custom_call.1} parent=43 // pred_check
          %p934 = pneg %p933
        $region50: #{tpu_custom_call.1} parent=43 // pred_check_branch
          %936 = sbr.rel (%p934) target = $region52
        $region51: #{tpu_custom_call.1} parent=43 // pred_region
          %v937 = vld [vmem:[#allocation3] sm:$0x1]
          %v938 = vld [vmem:[#allocation4] sm:$0x1]
          %940 = vset.pattern.permute.xlu0 0
          %941 = vperm.xlu0 %940, %v937
          %v942 = vpop.permute.xlu0 %941
          %v944 = vlaneseq
          %v945 = vshrl.u32 %v944, 7
          %v946 = vsub.s32 0, %v945
          %v947 = vrot.slane %v942, %v946
          %v948 = vrcp.pop %v947
          %v949 = vmul.f32 %v938, %v948
          %v950 = vld [vmem:[%s4] sm:$0x1]
          %v951 = vmul.f32 %v949, %v950
          %v952 = vsel %vm930, %v951, 0.0
          %953 = vadd.xlane.f32.xlu0 %v952
          %v954 = vpop.xlane.xlu0 %953
          %s955 = sld [smem:[#allocation5]]
          %v956 = vstv %s955
          %v957 = vadd.f32 %v954, %v956
          %v958 = vxor.u32 %v957, 2147483648
          %v959 = vmul.f32 %v958, 1.442695
          %v960 = vpow.pop %v959
          %v961 = vadd.f32 %v960, 1.0
          %v962 = vrcp.pop %v961
          %v963 = vmul.f32 1.0, %v962
          %964 = vst.msk [vmem:[#allocation6] sm:$0x1] %vm867, %v963
          %vm965 = vcmp.ge.f32.partialorder %v963, 0.5
          %v966 = vsel %vm965, 1, 0
          %v967 = vcvt.s32.f32 %v966
          %968 = vst.msk [vmem:[#allocation8] sm:$0x1] %vm867, %v967
          %v969 = vld [vmem:[#allocation2] sm:$0x1]
          %970 = vst.msk [vmem:[#allocation11] sm:$0x1] %vm867, %v969
          %971 = vst.msk [vmem:[#allocation12] sm:$0x1] %vm867, %v937
        $region52: #{tpu_custom_call.1} parent=43 // pred_fallthru
          _
        %s972 = sand.u32 %s26, 1
        %s973 = scalar_lea.sflag [#allocation7], %s972
        %s974 = sand.u32 %s207, 1
        %s975 = scalar_lea.vmem [#allocation10], %s974
        // Predicated region
        $region53: #{tpu_custom_call.1} parent=43 // pred_check
          %p976 = pneg %p170
        $region54: #{tpu_custom_call.1} parent=43 // pred_check_branch
          %978 = sbr.rel (%p976) target = $region56
        $region55: #{tpu_custom_call.1} parent=43 // pred_region
          %s980 = ssub.s32 16, 16
          %981 = vsyncadd [#allocation7], %s980
          %s983 = sshll.u32 [#allocation6], 4
          %s984 = int_to_ptr.vmem [resolvable:$true] %s983
          %986 = dma.vmem_to_hbm [thread:$0]  %s984, 16, %s6, [#allocation7]
        $region56: #{tpu_custom_call.1} parent=43 // pred_fallthru
          _
        // Predicated region
        $region57: #{tpu_custom_call.1} parent=43 // pred_check
          %p987 = pneg %p191
        $region58: #{tpu_custom_call.1} parent=43 // pred_check_branch
          %989 = sbr.rel (%p987) target = $region60
        $region59: #{tpu_custom_call.1} parent=43 // pred_region
          %s991 = ssub.s32 16, 16
          %992 = vsyncadd [#allocation9], %s991
          %s994 = sshll.u32 [#allocation8], 4
          %s995 = int_to_ptr.vmem [resolvable:$true] %s994
          %997 = dma.vmem_to_hbm [thread:$0]  %s995, 16, %s7, [#allocation9]
        $region60: #{tpu_custom_call.1} parent=43 // pred_fallthru
          _
        // Predicated region
        $region61: #{tpu_custom_call.1} parent=43 // pred_check
          %p998 = pneg %p217
        $region62: #{tpu_custom_call.1} parent=43 // pred_check_branch
          %1000 = sbr.rel (%p998) target = $region64
        $region63: #{tpu_custom_call.1} parent=43 // pred_region
          %s1002 = ssub.s32 16, 16
          %1003 = vsyncadd %s973, %s1002
          %s1004 = smul.addr %s26, 16
          %s1005 = scalar_lea.hbm %s8, %s1004
          %s1007 = sshll.u32 %s975, 4
          %s1008 = int_to_ptr.vmem [resolvable:$true] %s1007
          %1010 = dma.vmem_to_hbm [thread:$0]  %s1008, 16, %s1005, %s973
        $region64: #{tpu_custom_call.1} parent=43 // pred_fallthru
          _
        // Predicated region
        $region65: #{tpu_custom_call.1} parent=43 // pred_check
          %p1011 = pneg %p238
        $region66: #{tpu_custom_call.1} parent=43 // pred_check_branch
          %1013 = sbr.rel (%p1011) target = $region68
        $region67: #{tpu_custom_call.1} parent=43 // pred_region
          %s1015 = ssub.s32 16, 16
          %1016 = vsyncadd [#allocation9], %s1015
          %s1018 = sshll.u32 [#allocation11], 4
          %s1019 = int_to_ptr.vmem [resolvable:$true] %s1018
          %1021 = dma.vmem_to_hbm [thread:$0]  %s1019, 16, %s9, [#allocation9]
        $region68: #{tpu_custom_call.1} parent=43 // pred_fallthru
          _
        // Predicated region
        $region69: #{tpu_custom_call.1} parent=43 // pred_check
          %p1022 = pneg %p259
        $region70: #{tpu_custom_call.1} parent=43 // pred_check_branch
          %1024 = sbr.rel (%p1022) target = $region72
        $region71: #{tpu_custom_call.1} parent=43 // pred_region
          %s1026 = ssub.s32 16, 16
          %1027 = vsyncadd [#allocation13], %s1026
          %s1029 = sshll.u32 [#allocation12], 4
          %s1030 = int_to_ptr.vmem [resolvable:$true] %s1029
          %1032 = dma.vmem_to_hbm [thread:$0]  %s1030, 16, %s10, [#allocation13]
        $region72: #{tpu_custom_call.1} parent=43 // pred_fallthru
          _
        // Predicated region
        $region73: #{tpu_custom_call.1} parent=43 // pred_check
          %p1033 = pneg %p170
        $region74: #{tpu_custom_call.1} parent=43 // pred_check_branch
          %1035 = sbr.rel (%p1033) target = $region76
        $region75: #{tpu_custom_call.1} parent=43 // pred_region
          %1036 = dma.done [#allocation7], 16
        $region76: #{tpu_custom_call.1} parent=43 // pred_fallthru
          _
        // Predicated region
        $region77: #{tpu_custom_call.1} parent=43 // pred_check
          %p1037 = pneg %p191
        $region78: #{tpu_custom_call.1} parent=43 // pred_check_branch
          %1039 = sbr.rel (%p1037) target = $region80
        $region79: #{tpu_custom_call.1} parent=43 // pred_region
          %1040 = dma.done [#allocation9], 16
        $region80: #{tpu_custom_call.1} parent=43 // pred_fallthru
          _
        // Predicated region
        $region81: #{tpu_custom_call.1} parent=43 // pred_check
          %p1041 = pneg %p238
        $region82: #{tpu_custom_call.1} parent=43 // pred_check_branch
          %1043 = sbr.rel (%p1041) target = $region84
        $region83: #{tpu_custom_call.1} parent=43 // pred_region
          %1044 = dma.done [#allocation9], 16
        $region84: #{tpu_custom_call.1} parent=43 // pred_fallthru
          _
        // Predicated region
        $region85: #{tpu_custom_call.1} parent=43 // pred_check
          %p1045 = pneg %p259
        $region86: #{tpu_custom_call.1} parent=43 // pred_check_branch
          %1047 = sbr.rel (%p1045) target = $region88
        $region87: #{tpu_custom_call.1} parent=43 // pred_region
          %1048 = dma.done [#allocation13], 16
        $region88: #{tpu_custom_call.1} parent=43 // pred_fallthru
          _
      $region44: #{tpu_custom_call.1} parent=5 // pred_fallthru
        _
      %p1049 = scmp.le.s32.totalorder 2, %s21
      // Predicated region
      $region89: #{tpu_custom_call.1} parent=5 // pred_check
        %p1050 = pneg %p1049
      $region90: #{tpu_custom_call.1} parent=5 // pred_check_branch
        %1052 = sbr.rel (%p1050) target = $region92
      $region91: #{tpu_custom_call.1} parent=5 // pred_region
        %s1053 = ssub.s32 %s21, 2
        // Predicated region
        $region93: #{tpu_custom_call.1} parent=91 // pred_check
          %p1054 = pneg %p223
        $region94: #{tpu_custom_call.1} parent=91 // pred_check_branch
          %1056 = sbr.rel (%p1054) target = $region96
        $region95: #{tpu_custom_call.1} parent=91 // pred_region
          %s1057 = sand.u32 %s27, 1
          %s1058 = scalar_lea.sflag [#allocation7], %s1057
          %s1059 = sand.u32 %s208, 1
          %s1060 = scalar_lea.vmem [#allocation10], %s1059
          %1061 = dma.done %s1058, 16
        $region96: #{tpu_custom_call.1} parent=91 // pred_fallthru
          _
      $region92: #{tpu_custom_call.1} parent=5 // pred_fallthru
        _
    $region6: #{tpu_custom_call.1} parent=1 // loop_footer
      %s25 = sadd.s32 1, %s21
    $region7: #{tpu_custom_call.1} parent=1 // loop_footer_branch
      %20 = sbr.rel target = $region3
    $region8: #{tpu_custom_call.1} parent=1 // loop_exit
      _
    %1062 = vsyncpa [#allocation7], 1
    %s1063 = scalar_lea.sflag [#allocation7], 1
    %1064 = vsyncpa %s1063, 1
    %1065 = vsyncpa [#allocation9], 1
    %1066 = vsyncpa [#allocation13], 1

</llo_original>
